<compile_context>
chip_gen: v7x
topology: tpu7x:2x2x1
jax: 0.10.0
libtpu: 0.0.40
codegen_flags: <defaults>
</compile_context>

<pallas_src>
import numpy as np
import jax
import jax.numpy as jnp
from jax.experimental import pallas as pl
from jax.experimental.pallas import tpu as pltpu

EPS = 1e-5  # nn.BatchNorm2d default eps


def _bn_stats_kernel(x_ref, a_ref, stats_ref):
    """Pass 1: per-chunk partial sum / sum-of-squares of the conv columns.

    x_ref:     (B, H, K)      bf16, K = 3*(W+2)*Cin (kh windows concatenated)
    a_ref:     (K, ncols)     bf16 banded conv weight (resident)
    stats_ref: (1, 2, ncols)  f32  [row 0: sum, row 1: sum of squares]
    """
    b, h, k = x_ref.shape
    xm = x_ref[...].reshape(b * h, k)
    z = jnp.dot(xm, a_ref[...], preferred_element_type=jnp.float32)
    s = jnp.sum(z, axis=0, keepdims=True)
    ss = jnp.sum(z * z, axis=0, keepdims=True)
    stats_ref[0] = jnp.concatenate([s, ss], axis=0)


def _apply_kernel(x_ref, a_ref, scale_ref, shift_ref, o_ref):
    """Pass 2: conv matmul -> BN scale -> 2x2 max-pool -> BN shift -> tanh.

    o_ref: (B, Ho, Wo*Cout) lane-dense output block.
    """
    b, h, k = x_ref.shape
    ncols = a_ref.shape[1]
    half = ncols // 2
    xm = x_ref[...].reshape(b * h, k)
    z = jnp.dot(xm, a_ref[...], preferred_element_type=jnp.float32)
    z = z * scale_ref[...]                           # BN scale, pre-pool (sign-safe)
    # MaxPool2d(2,2): width pool = max of even-w / odd-w lane halves,
    # height pool = max over consecutive row pairs.
    zw = jnp.maximum(z[:, :half], z[:, half:])       # (B*H, Wo*Cout)
    zr = zw.reshape(b, h // 2, 2, half)
    zp = jnp.maximum(zr[:, :, 0, :], zr[:, :, 1, :]) # (B, Ho, Wo*Cout)
    # BN shift is per-(wo,co) constant -> exact to add after the max.
    o_ref[...] = jnp.tanh(zp + shift_ref[...])       # tanh once, AFTER the pool


def _build_banded_weight(w, width):
    """torch OIHW (Cout, Cin, 3, 3) -> A of shape (3*(W+2)*Cin, W*Cout).

      A[kh*(W+2)*Cin + (w+kw)*Cin + ci, col(w,co)] = W[co, ci, kh, kw]
      col(w, co) = ((w % 2)*Wo + w//2)*Cout + co     (w-parity, wo, co)

    Built with a single scatter over precomputed numpy-constant indices.
    """
    cout, cin, _, _ = w.shape
    wo = width // 2
    wpc = (width + 2) * cin
    ncols = width * cout
    khs, kws, wis, cis, cos = np.meshgrid(
        np.arange(3), np.arange(3), np.arange(width),
        np.arange(cin), np.arange(cout), indexing="ij")
    rows = (khs * wpc + (wis + kws) * cin + cis).ravel()
    cols = (((wis % 2) * wo + wis // 2) * cout + cos).ravel()
    wt = jnp.transpose(w, (2, 3, 1, 0))              # (kh, kw, ci, co)
    vals = jnp.broadcast_to(wt[:, :, None, :, :],
                            (3, 3, width, cin, cout)).reshape(-1)
    a = jnp.zeros((3 * wpc, ncols), jnp.float32)
    return a.at[rows, cols].set(vals)


def _batch_block(n, h, target_m=256):
    """Largest divisor B of n with B*h <= target_m (MXU M-dim occupancy)."""
    b_max = max(1, target_m // h)
    best = 1
    for d in range(1, min(n, b_max) + 1):
        if n % d == 0:
            best = d
    return best


def init_params(key, in_channels, out_channels=16):
    """Deterministic synthetic parameters (PyTorch-default-style init)."""
    k1, k2 = jax.random.split(key)
    fan_in = in_channels * 3 * 3
    bound = 1.0 / (fan_in ** 0.5)
    w = jax.random.uniform(k1, (out_channels, in_channels, 3, 3),
                           jnp.float32, -bound, bound)   # OIHW like torch
    b = jax.random.uniform(k2, (out_channels,), jnp.float32, -bound, bound)
    gamma = jnp.ones((out_channels,), jnp.float32)        # BN weight init
    beta = jnp.zeros((out_channels,), jnp.float32)        # BN bias init
    return w, b, gamma, beta


def stream2_forward(x, params):
    """x: (N, Cin, H, W) float32 NCHW (PyTorch convention). Returns NCHW."""
    w, b_conv, gamma, beta = params   # b_conv unused: cancels in train-mode BN
    N, Cin, H, W = x.shape
    Cout = w.shape[0]
    assert H % 2 == 0 and W % 2 == 0, "MaxPool2d(2,2) needs even spatial dims"
    Ho, Wo = H // 2, W // 2
    WpC = (W + 2) * Cin
    K = 3 * WpC                        # merged conv reduction depth
    ncols = W * Cout                   # per-row conv-output columns
    half = Wo * Cout                   # lane width of the pooled output

    B = _batch_block(N, H)             # images per matmul block (M = B*H)
    num_chunks = N // B

    # NCHW -> padded NHWC -> the 3 kh-shifted row windows concatenated along
    # the lane axis, so the conv is ONE (B*H, K) @ (K, ncols) matmul.
    x_nhwc = jnp.transpose(x, (0, 2, 3, 1))
    x_pad = jnp.pad(x_nhwc, ((0, 0), (1, 1), (1, 1), (0, 0)))
    x2 = x_pad.reshape(N, H + 2, WpC)
    x3 = jnp.concatenate([x2[:, kh:kh + H, :] for kh in range(3)], axis=-1)
    x3 = x3.astype(jnp.bfloat16)       # bf16 MXU operands, f32 accumulation

    a = _build_banded_weight(w, W).astype(jnp.bfloat16)   # (K, ncols)
    # TODO(synk): for large W*Cin, tile A's column dim with a second grid axis
    # (or Buffered(1) on a_spec) so the resident A fits v7x's 64 MiB VMEM.

    x_spec = pl.BlockSpec((B, H, K), lambda g: (g, 0, 0))
    a_spec = pl.BlockSpec((K, ncols), lambda g: (0, 0))
    vmem_limit = 32 * 1024 * 1024      # explicit; per-step working set << 1 MiB

    # ---- pass 1: per-chunk partial BN statistics (parallel across chunks) ---
    stats = pl.pallas_call(
        _bn_stats_kernel,
        grid=(num_chunks,),
        in_specs=[x_spec, a_spec],
        out_specs=pl.BlockSpec((1, 2, ncols), lambda g: (g, 0, 0)),
        out_shape=jax.ShapeDtypeStruct((num_chunks, 2, ncols), jnp.float32),
        compiler_params=pltpu.CompilerParams(
            dimension_semantics=("parallel",),
            vmem_limit_bytes=vmem_limit),
    )(x3, a)

    count = float(N * H * W)
    s_cols = jnp.sum(stats[:, 0, :], axis=0)          # reduce chunk partials
    ss_cols = jnp.sum(stats[:, 1, :], axis=0)
    mean = s_cols.reshape(W, Cout).sum(axis=0) / count
    ex2 = ss_cols.reshape(W, Cout).sum(axis=0) / count
    var = ex2 - mean * mean                            # biased, like torch BN
    inv = jax.lax.rsqrt(var + EPS)
    scale = gamma * inv
    shift = beta - mean * scale                        # conv bias cancels exactly
    scale_cols = jnp.tile(scale, W).reshape(1, ncols)  # per conv column (pre-pool)
    shift_half = jnp.tile(shift, Wo).reshape(1, half)  # per pooled column

    # ---- pass 2: conv + BN scale -> max-pool -> BN shift -> tanh ------------
    out2 = pl.pallas_call(
        _apply_kernel,
        grid=(num_chunks,),
        in_specs=[x_spec, a_spec,
                  pl.BlockSpec((1, ncols), lambda g: (0, 0)),
                  pl.BlockSpec((1, half), lambda g: (0, 0))],
        out_specs=pl.BlockSpec((B, Ho, half), lambda g: (g, 0, 0)),
        out_shape=jax.ShapeDtypeStruct((N, Ho, half), jnp.float32),
        compiler_params=pltpu.CompilerParams(
            dimension_semantics=("parallel",),
            vmem_limit_bytes=vmem_limit),
    )(x3, a, scale_cols, shift_half)

    # (N, Ho, Wo*Cout) -> NCHW to match the PyTorch module output.
    return jnp.transpose(out2.reshape(N, Ho, Wo, Cout), (0, 3, 1, 2))


def stream2_reference(x, params):
    """Pure-JAX f32 reference of the PyTorch forward (training-mode BN)."""
    w, b, gamma, beta = params
    y = jax.lax.conv_general_dilated(
        x, w, window_strides=(1, 1), padding=((1, 1), (1, 1)),
        dimension_numbers=("NCHW", "OIHW", "NCHW")) + b.reshape(1, -1, 1, 1)
    mean = y.mean(axis=(0, 2, 3), keepdims=True)
    var = y.var(axis=(0, 2, 3), keepdims=True)         # biased, like torch BN
    yn = (y - mean) / jnp.sqrt(var + EPS)
    yn = yn * gamma.reshape(1, -1, 1, 1) + beta.reshape(1, -1, 1, 1)
    t = jnp.tanh(yn)
    N, C, H, W = t.shape
    return t.reshape(N, C, H // 2, 2, W // 2, 2).max(axis=(3, 5))


if __name__ == "__main__":
    key = jax.random.PRNGKey(0)
    kx, kp = jax.random.split(key)

    N, Cin, H, W = 2, 4, 16, 16
    x = jax.random.normal(kx, (N, Cin, H, W), jnp.float32)
    params = init_params(kp, Cin)

    fwd = jax.jit(stream2_forward)
    out = jax.block_until_ready(fwd(x, params))
    ref = stream2_reference(x, params)

    assert out.shape == (N, 16, H // 2, W // 2), out.shape
    err = float(jnp.max(jnp.abs(out - ref)))
    assert err < 5e-2, err   # bf16 MXU operands -> relaxed vs f32 reference
    print("KERNEL_OK")
</pallas_src>

<mosaic_0001>
module attributes {stable_mosaic.version = 11 : i64} {
  func.func @_bn_stats_kernel(%arg0: i32, %arg1: memref<2x16x216xbf16, #tpu.memory_space<vmem>>, %arg2: memref<216x256xbf16, #tpu.memory_space<vmem>>, %arg3: memref<1x2x256xf32, #tpu.memory_space<vmem>>) attributes {dimension_semantics = [#tpu.dimension_semantics<parallel>], iteration_bounds = array<i64: 1>, scalar_prefetch = 0 : i64, scratch_operands = 0 : i64, tpu.core_type = #tpu.core_type<tc>, window_params = [{transform_indices = @transform_0, window_bounds = array<i64: 2, 16, 216>}, {pipeline_mode = #tpu.pipeline_mode<synchronous>, transform_indices = @transform_1, window_bounds = array<i64: 216, 256>}, {transform_indices = @transform_2, window_bounds = array<i64: 1, 2, 256>}]} {
    %c0 = arith.constant 0 : index
    %c0_0 = arith.constant 0 : index
    %c0_1 = arith.constant 0 : index
    %0 = vector.load %arg1[%c0, %c0_0, %c0_1] : memref<2x16x216xbf16, #tpu.memory_space<vmem>>, vector<2x16x216xbf16>
    %1 = vector.shape_cast %0 : vector<2x16x216xbf16> to vector<32x216xbf16>
    %c0_2 = arith.constant 0 : index
    %c0_3 = arith.constant 0 : index
    %2 = vector.load %arg2[%c0_2, %c0_3] : memref<216x256xbf16, #tpu.memory_space<vmem>>, vector<216x256xbf16>
    %cst = arith.constant dense<0.000000e+00> : vector<32x256xf32>
    %3 = tpu.matmul %1, %2, %cst {dimension_numbers = #tpu.dot_dimension_numbers<[1], [0], [0], [1], [0, 0, 1, 1], [], []>} : vector<32x216xbf16>, vector<216x256xbf16>, vector<32x256xf32> -> vector<32x256xf32>
    %cst_4 = arith.constant dense<0.000000e+00> : vector<256xf32>
    %4 = vector.multi_reduction <add>, %3, %cst_4 [0] : vector<32x256xf32> to vector<256xf32>
    %5 = vector.shape_cast %4 : vector<256xf32> to vector<1x256xf32>
    %6 = arith.mulf %3, %3 : vector<32x256xf32>
    %cst_5 = arith.constant dense<0.000000e+00> : vector<256xf32>
    %7 = vector.multi_reduction <add>, %6, %cst_5 [0] : vector<32x256xf32> to vector<256xf32>
    %8 = vector.shape_cast %7 : vector<256xf32> to vector<1x256xf32>
    %9 = tpu.concatenate %5, %8 in 0 : vector<1x256xf32>, vector<1x256xf32> -> vector<2x256xf32>
    %c0_6 = arith.constant 0 : index
    %c0_7 = arith.constant 0 : index
    %c0_8 = arith.constant 0 : index
    %10 = vector.load %arg3[%c0_6, %c0_7, %c0_8] : memref<1x2x256xf32, #tpu.memory_space<vmem>>, vector<1x2x256xf32>
    %11 = vector.shape_cast %10 : vector<1x2x256xf32> to vector<2x256xf32>
    %12 = vector.shape_cast %9 : vector<2x256xf32> to vector<1x2x256xf32>
    tpu.vector_store %arg3[%c0_6, %c0_7, %c0_8], %12 {strides = array<i32>} : memref<1x2x256xf32, #tpu.memory_space<vmem>>, vector<1x2x256xf32>,
    return
  }
  func.func @transform_0(%arg0: i32) -> (i32, i32, i32) {
    %c0_i32 = arith.constant 0 : i32
    %c0_i32_0 = arith.constant 0 : i32
    %c0_i32_1 = arith.constant 0 : i32
    return %arg0, %c0_i32, %c0_i32_0 : i32, i32, i32
  }
  func.func @transform_1(%arg0: i32) -> (i32, i32) {
    %c0_i32 = arith.constant 0 : i32
    %c0_i32_0 = arith.constant 0 : i32
    %c0_i32_1 = arith.constant 0 : i32
    return %c0_i32, %c0_i32_0 : i32, i32
  }
  func.func @transform_2(%arg0: i32) -> (i32, i32, i32) {
    %c0_i32 = arith.constant 0 : i32
    %c0_i32_0 = arith.constant 0 : i32
    %c0_i32_1 = arith.constant 0 : i32
    return %arg0, %c0_i32, %c0_i32_0 : i32, i32, i32
  }
}

module attributes {stable_mosaic.version = 11 : i64} {
  func.func @_apply_kernel(%arg0: i32, %arg1: memref<2x16x216xbf16, #tpu.memory_space<vmem>>, %arg2: memref<216x256xbf16, #tpu.memory_space<vmem>>, %arg3: memref<1x256xf32, #tpu.memory_space<vmem>>, %arg4: memref<1x128xf32, #tpu.memory_space<vmem>>, %arg5: memref<2x8x128xf32, #tpu.memory_space<vmem>>) attributes {dimension_semantics = [#tpu.dimension_semantics<parallel>], iteration_bounds = array<i64: 1>, scalar_prefetch = 0 : i64, scratch_operands = 0 : i64, tpu.core_type = #tpu.core_type<tc>, window_params = [{transform_indices = @transform_0, window_bounds = array<i64: 2, 16, 216>}, {pipeline_mode = #tpu.pipeline_mode<synchronous>, transform_indices = @transform_1, window_bounds = array<i64: 216, 256>}, {pipeline_mode = #tpu.pipeline_mode<synchronous>, transform_indices = @transform_2, window_bounds = array<i64: 1, 256>}, {pipeline_mode = #tpu.pipeline_mode<synchronous>, transform_indices = @transform_3, window_bounds = array<i64: 1, 128>}, {transform_indices = @transform_4, window_bounds = array<i64: 2, 8, 128>}]} {
    %c0 = arith.constant 0 : index
    %c0_0 = arith.constant 0 : index
    %c0_1 = arith.constant 0 : index
    %0 = vector.load %arg1[%c0, %c0_0, %c0_1] : memref<2x16x216xbf16, #tpu.memory_space<vmem>>, vector<2x16x216xbf16>
    %1 = vector.shape_cast %0 : vector<2x16x216xbf16> to vector<32x216xbf16>
    %c0_2 = arith.constant 0 : index
    %c0_3 = arith.constant 0 : index
    %2 = vector.load %arg2[%c0_2, %c0_3] : memref<216x256xbf16, #tpu.memory_space<vmem>>, vector<216x256xbf16>
    %cst = arith.constant dense<0.000000e+00> : vector<32x256xf32>
    %3 = tpu.matmul %1, %2, %cst {dimension_numbers = #tpu.dot_dimension_numbers<[1], [0], [0], [1], [0, 0, 1, 1], [], []>} : vector<32x216xbf16>, vector<216x256xbf16>, vector<32x256xf32> -> vector<32x256xf32>
    %c0_4 = arith.constant 0 : index
    %c0_5 = arith.constant 0 : index
    %4 = vector.load %arg3[%c0_4, %c0_5] : memref<1x256xf32, #tpu.memory_space<vmem>>, vector<1x256xf32>
    %5 = vector.broadcast %4 : vector<1x256xf32> to vector<32x256xf32>
    %6 = arith.mulf %3, %5 : vector<32x256xf32>
    %7 = vector.extract_strided_slice %6 {offsets = [0, 0], sizes = [32, 128], strides = [1, 1]} : vector<32x256xf32> to vector<32x128xf32>
    %8 = vector.extract_strided_slice %6 {offsets = [0, 128], sizes = [32, 128], strides = [1, 1]} : vector<32x256xf32> to vector<32x128xf32>
    %9 = arith.maximumf %7, %8 : vector<32x128xf32>
    %10 = vector.shape_cast %9 : vector<32x128xf32> to vector<2x8x2x128xf32>
    %11 = vector.extract_strided_slice %10 {offsets = [0, 0, 0, 0], sizes = [2, 8, 1, 128], strides = [1, 1, 1, 1]} : vector<2x8x2x128xf32> to vector<2x8x1x128xf32>
    %12 = vector.shape_cast %11 : vector<2x8x1x128xf32> to vector<2x8x128xf32>
    %13 = vector.extract_strided_slice %10 {offsets = [0, 0, 1, 0], sizes = [2, 8, 1, 128], strides = [1, 1, 1, 1]} : vector<2x8x2x128xf32> to vector<2x8x1x128xf32>
    %14 = vector.shape_cast %13 : vector<2x8x1x128xf32> to vector<2x8x128xf32>
    %15 = arith.maximumf %12, %14 : vector<2x8x128xf32>
    %c0_6 = arith.constant 0 : index
    %c0_7 = arith.constant 0 : index
    %16 = vector.load %arg4[%c0_6, %c0_7] : memref<1x128xf32, #tpu.memory_space<vmem>>, vector<1x128xf32>
    %17 = vector.shape_cast %16 : vector<1x128xf32> to vector<1x1x128xf32>
    %18 = vector.broadcast %17 : vector<1x1x128xf32> to vector<2x8x128xf32>
    %19 = arith.addf %15, %18 : vector<2x8x128xf32>
    %20 = math.tanh %19 : vector<2x8x128xf32>
    %c0_8 = arith.constant 0 : index
    %c0_9 = arith.constant 0 : index
    %c0_10 = arith.constant 0 : index
    %21 = vector.load %arg5[%c0_8, %c0_9, %c0_10] : memref<2x8x128xf32, #tpu.memory_space<vmem>>, vector<2x8x128xf32>
    tpu.vector_store %arg5[%c0_8, %c0_9, %c0_10], %20 {strides = array<i32>} : memref<2x8x128xf32, #tpu.memory_space<vmem>>, vector<2x8x128xf32>,
    return
  }
  func.func @transform_0(%arg0: i32) -> (i32, i32, i32) {
    %c0_i32 = arith.constant 0 : i32
    %c0_i32_0 = arith.constant 0 : i32
    %c0_i32_1 = arith.constant 0 : i32
    return %arg0, %c0_i32, %c0_i32_0 : i32, i32, i32
  }
  func.func @transform_1(%arg0: i32) -> (i32, i32) {
    %c0_i32 = arith.constant 0 : i32
    %c0_i32_0 = arith.constant 0 : i32
    %c0_i32_1 = arith.constant 0 : i32
    return %c0_i32, %c0_i32_0 : i32, i32
  }
  func.func @transform_2(%arg0: i32) -> (i32, i32) {
    %c0_i32 = arith.constant 0 : i32
    %c0_i32_0 = arith.constant 0 : i32
    %c0_i32_1 = arith.constant 0 : i32
    return %c0_i32, %c0_i32_0 : i32, i32
  }
  func.func @transform_3(%arg0: i32) -> (i32, i32) {
    %c0_i32 = arith.constant 0 : i32
    %c0_i32_0 = arith.constant 0 : i32
    %c0_i32_1 = arith.constant 0 : i32
    return %c0_i32, %c0_i32_0 : i32, i32
  }
  func.func @transform_4(%arg0: i32) -> (i32, i32, i32) {
    %c0_i32 = arith.constant 0 : i32
    %c0_i32_0 = arith.constant 0 : i32
    %c0_i32_1 = arith.constant 0 : i32
    return %arg0, %c0_i32, %c0_i32_0 : i32, i32, i32
  }
}

</mosaic_0001>

<llo_original>
// kernel: tile.18
$region0: #{tile.18}
  #allocation0 [shape = 's32[1]{0}', space=sflag, size = 0x4, scoped, tag = 'scoped memory for tile.18']
  %s0 = inlined_call_operand.vmem [shape: f32[16], index: 0, kind: input, shape index: {}]
  %s1 = inlined_call_operand.vmem [shape: f32[8,16], index: 1, kind: output, shape index: {}]
  // Predicated region
  $region2: #{tile.18} parent=0 // pred_check
    _
  $region3: #{tile.18} parent=0 // pred_check_branch
    %3 = sbr.rel (0) target = $region5
  $region4: #{tile.18} parent=0 // pred_region
    _
  $region5: #{tile.18} parent=0 // pred_fallthru
    _
  %v4 = vld [vmem:[%s0] ss:$0 sm:$0xff]
  %5 = vst [vmem:[%s1] sm:$0xff] %v4

// kernel: tile.19
$region0: #{tile.19}
  %s0 = inlined_call_operand.vmem [shape: f32[8,16], index: 0, kind: input, shape index: {}]
  %s1 = inlined_call_operand.vmem [shape: f32[1,128], index: 1, kind: output, shape index: {}]
  $region1: #{tile.19} parent=0
    #allocation0 [shape = 'u8[4096]{0}', space=vmem, size = 0x1000, scoped, tag = 'scoped mem for output reshape']
    %v2 = vld [vmem:[%s0] sm:$0x1]
    %vm3 = vcmask 130048
    %4 = vst.msk [vmem:[#allocation0] sm:$0x1] %vm3, %v2
    %s5 = scalar_lea.vmem %s0, 7
    %v6 = vld [vmem:[%s5] sm:$0x1]
    %7 = vrot.lane.b32.xlu0 %v6, 112
    %v8 = vpop.permute.xlu0 %7
    %vm9 = vcmask 1048448
    %10 = vst.msk [vmem:[#allocation0] sm:$0x1] %vm9, %v8
    %s11 = scalar_lea.vmem %s0, 6
    %v12 = vld [vmem:[%s11] sm:$0x1]
    %13 = vrot.lane.b32.xlu0 %v12, 96
    %v14 = vpop.permute.xlu0 %13
    %vm15 = vcmask 917248
    %16 = vst.msk [vmem:[#allocation0] sm:$0x1] %vm15, %v14
    %s17 = scalar_lea.vmem %s0, 5
    %v18 = vld [vmem:[%s17] sm:$0x1]
    %19 = vrot.lane.b32.xlu0 %v18, 80
    %v20 = vpop.permute.xlu0 %19
    %vm21 = vcmask 786048
    %22 = vst.msk [vmem:[#allocation0] sm:$0x1] %vm21, %v20
    %s23 = scalar_lea.vmem %s0, 4
    %v24 = vld [vmem:[%s23] sm:$0x1]
    %25 = vrot.lane.b32.xlu0 %v24, 64
    %v26 = vpop.permute.xlu0 %25
    %vm27 = vcmask 654848
    %28 = vst.msk [vmem:[#allocation0] sm:$0x1] %vm27, %v26
    %s29 = scalar_lea.vmem %s0, 3
    %v30 = vld [vmem:[%s29] sm:$0x1]
    %31 = vrot.lane.b32.xlu0 %v30, 48
    %v32 = vpop.permute.xlu0 %31
    %vm33 = vcmask 523648
    %34 = vst.msk [vmem:[#allocation0] sm:$0x1] %vm33, %v32
    %s35 = scalar_lea.vmem %s0, 2
    %v36 = vld [vmem:[%s35] sm:$0x1]
    %37 = vrot.lane.b32.xlu0 %v36, 32
    %v38 = vpop.permute.xlu0 %37
    %vm39 = vcmask 392448
    %40 = vst.msk [vmem:[#allocation0] sm:$0x1] %vm39, %v38
    %s41 = scalar_lea.vmem %s0, 1
    %v42 = vld [vmem:[%s41] sm:$0x1]
    %43 = vrot.lane.b32.xlu0 %v42, 16
    %v44 = vpop.permute.xlu0 %43
    %vm45 = vcmask 261248
    %46 = vst.msk [vmem:[#allocation0] sm:$0x1] %vm45, %v44
    %s48 = sshllo.u32 0, 1
    %v50 = vld [vmem:[#allocation0] sm:%s48]
    %s51 = sshllo.u32 0, 1
    %52 = vst [vmem:[%s1] sm:%s51] %v50

// kernel: tile.13
$region0: #{tile.13}
  #allocation0 [shape = 's32[1]{0}', space=sflag, size = 0x4, scoped, tag = 'scoped memory for tile.13']
  %s0 = inlined_call_operand.vmem [shape: f32[16], index: 0, kind: input, shape index: {}]
  %s1 = inlined_call_operand.vmem [shape: f32[16,16], index: 1, kind: output, shape index: {}]
  // Predicated region
  $region2: #{tile.13} parent=0 // pred_check
    _
  $region3: #{tile.13} parent=0 // pred_check_branch
    %3 = sbr.rel (0) target = $region5
  $region4: #{tile.13} parent=0 // pred_region
    _
  $region5: #{tile.13} parent=0 // pred_fallthru
    _
  %v4 = vld [vmem:[%s0] ss:$0 sm:$0xff]
  %5 = vst [vmem:[%s1] sm:$0xff] %v4
  %s6 = scalar_lea.vmem %s1, 8
  %7 = vst [vmem:[%s6] sm:$0xff] %v4

// kernel: tile.14
$region0: #{tile.14}
  %s0 = inlined_call_operand.vmem [shape: f32[16,16], index: 0, kind: input, shape index: {}]
  %s1 = inlined_call_operand.vmem [shape: f32[1,256], index: 1, kind: output, shape index: {}]
  $region1: #{tile.14} parent=0
    #allocation0 [shape = 'u8[8192]{0}', space=vmem, size = 0x2000, scoped, tag = 'scoped mem for output reshape']
    %s2 = smov 3
    %v3 = vld [vmem:[%s0] ss:$8 sm:%s2]
    %vm4 = vcmask 130048
    %5 = vst.msk [vmem:[#allocation0] ss:$8 sm:$0x3] %vm4, %v3
    %s6 = scalar_lea.vmem %s0, 7
    %s7 = smov 3
    %v8 = vld [vmem:[%s6] ss:$8 sm:%s7]
    %9 = vrot.lane.b32.xlu0 %v8, 112
    %v10 = vpop.permute.xlu0 %9
    %vm11 = vcmask 1048448
    %12 = vst.msk [vmem:[#allocation0] ss:$8 sm:$0x3] %vm11, %v10
    %s13 = scalar_lea.vmem %s0, 6
    %s14 = smov 3
    %v15 = vld [vmem:[%s13] ss:$8 sm:%s14]
    %16 = vrot.lane.b32.xlu0 %v15, 96
    %v17 = vpop.permute.xlu0 %16
    %vm18 = vcmask 917248
    %19 = vst.msk [vmem:[#allocation0] ss:$8 sm:$0x3] %vm18, %v17
    %s20 = scalar_lea.vmem %s0, 5
    %s21 = smov 3
    %v22 = vld [vmem:[%s20] ss:$8 sm:%s21]
    %23 = vrot.lane.b32.xlu0 %v22, 80
    %v24 = vpop.permute.xlu0 %23
    %vm25 = vcmask 786048
    %26 = vst.msk [vmem:[#allocation0] ss:$8 sm:$0x3] %vm25, %v24
    %s27 = scalar_lea.vmem %s0, 4
    %s28 = smov 3
    %v29 = vld [vmem:[%s27] ss:$8 sm:%s28]
    %30 = vrot.lane.b32.xlu0 %v29, 64
    %v31 = vpop.permute.xlu0 %30
    %vm32 = vcmask 654848
    %33 = vst.msk [vmem:[#allocation0] ss:$8 sm:$0x3] %vm32, %v31
    %s34 = scalar_lea.vmem %s0, 3
    %s35 = smov 3
    %v36 = vld [vmem:[%s34] ss:$8 sm:%s35]
    %37 = vrot.lane.b32.xlu0 %v36, 48
    %v38 = vpop.permute.xlu0 %37
    %vm39 = vcmask 523648
    %40 = vst.msk [vmem:[#allocation0] ss:$8 sm:$0x3] %vm39, %v38
    %s41 = scalar_lea.vmem %s0, 2
    %s42 = smov 3
    %v43 = vld [vmem:[%s41] ss:$8 sm:%s42]
    %44 = vrot.lane.b32.xlu0 %v43, 32
    %v45 = vpop.permute.xlu0 %44
    %vm46 = vcmask 392448
    %47 = vst.msk [vmem:[#allocation0] ss:$8 sm:$0x3] %vm46, %v45
    %s48 = scalar_lea.vmem %s0, 1
    %s49 = smov 3
    %v50 = vld [vmem:[%s48] ss:$8 sm:%s49]
    %51 = vrot.lane.b32.xlu0 %v50, 16
    %v52 = vpop.permute.xlu0 %51
    %vm53 = vcmask 261248
    %54 = vst.msk [vmem:[#allocation0] ss:$8 sm:$0x3] %vm53, %v52
    %s56 = sshllo.u32 0, 1
    %v58 = vld [vmem:[#allocation0] sm:%s56]
    %s59 = sshllo.u32 0, 1
    %60 = vst [vmem:[%s1] sm:%s59] %v58
    %s61 = scalar_lea.vmem [#allocation0], 8
    %v62 = vld [vmem:[%s61] sm:%s56]
    %s63 = sshllo.u32 0, 1
    %s64 = scalar_lea.vmem %s1, 1
    %65 = vst [vmem:[%s64] sm:%s63] %v62

// kernel: stream2_forward.2
$region0: #{stream2_forward.2}
  #allocation0 [shape = 'u32[]', space=smem, size = 0x4, offset = 0x4, fixed_abs, tag = 'smem constant byte address 0x4 - core index']
  #allocation1 [shape = 'u32[144,128]{1,0:T(1,128)}', space=vmem, size = 0x12000, scoped, tag = 'internal scratch']
  %s0 = inlined_call_operand.vmem [shape: bf16[2,16,216], index: 0, kind: input, shape index: {}]
  %s1 = inlined_call_operand.vmem [shape: bf16[216,256], index: 1, kind: input, shape index: {}]
  %s2 = inlined_call_operand.vmem [shape: f32[1,2,256], index: 2, kind: output, shape index: {}]
  %s3 = sld [smem:[#allocation0]]
  $region18: #{stream2_forward.2} parent=0
    _
  %s5 = ssub.s32 1, %s3
  %s6 = scalar_select 0, %s5, %s3
  // Predicated region
  $region2: #{stream2_forward.2} parent=0 // pred_check
    _
  $region3: #{stream2_forward.2} parent=0 // pred_check_branch
    %8 = sbr.rel (0) target = $region5
  $region4: #{stream2_forward.2} parent=0 // pred_region
    _
  $region5: #{stream2_forward.2} parent=0 // pred_fallthru
    _
  // Predicated region
  $region6: #{stream2_forward.2} parent=0 // pred_check
    _
  $region7: #{stream2_forward.2} parent=0 // pred_check_branch
    %10 = sbr.rel (0) target = $region9
  $region8: #{stream2_forward.2} parent=0 // pred_region
    _
  $region9: #{stream2_forward.2} parent=0 // pred_fallthru
    _
  %v12 = vld [vmem:[%s0] sm:$0xff]
  %v13 = vld [vmem:[%s0 + $0x8] sm:$0xff]
  %v14 = vld [vmem:[%s0 + $0x10] sm:$0xff]
  %v15 = vld [vmem:[%s0 + $0x18] sm:$0xff]
  %v16 = vld [vmem:[%s1] sm:$0xff]
  %v17 = vld [vmem:[%s1 + $0x8] sm:$0xff]
  %v18 = vld [vmem:[%s1 + $0x10] sm:$0xff]
  %v19 = vld [vmem:[%s1 + $0x18] sm:$0xff]
  %v20 = vld [vmem:[%s1 + $0x20] sm:$0xff]
  %v21 = vld [vmem:[%s1 + $0x28] sm:$0xff]
  %v22 = vld [vmem:[%s1 + $0x30] sm:$0xff]
  %v23 = vld [vmem:[%s1 + $0x38] sm:$0xff]
  %v24 = vld [vmem:[%s1 + $0x40] sm:$0xff]
  %v25 = vld [vmem:[%s1 + $0x48] sm:$0xff]
  %v26 = vld [vmem:[%s1 + $0x50] sm:$0xff]
  %v27 = vld [vmem:[%s1 + $0x58] sm:$0xff]
  %v28 = vld [vmem:[%s1 + $0x60] sm:$0xff]
  %v29 = vld [vmem:[%s1 + $0x68] sm:$0xff]
  %v30 = vld [vmem:[%s1 + $0x70] sm:$0xff]
  %v31 = vld [vmem:[%s1 + $0x78] sm:$0xff]
  %v32 = vld [vmem:[%s1 + $0x80] sm:$0xff]
  %v33 = vld [vmem:[%s1 + $0x88] sm:$0xff]
  %v34 = vld [vmem:[%s1 + $0x90] sm:$0xff]
  %v35 = vld [vmem:[%s1 + $0x98] sm:$0xff]
  %v36 = vld [vmem:[%s1 + $0xa0] sm:$0xff]
  %v37 = vld [vmem:[%s1 + $0xa8] sm:$0xff]
  %v38 = vld [vmem:[%s1 + $0xb0] sm:$0xff]
  %v39 = vld [vmem:[%s1 + $0xb8] sm:$0xff]
  %v40 = vld [vmem:[%s1 + $0xc0] sm:$0xff]
  %v41 = vld [vmem:[%s1 + $0xc8] sm:$0xff]
  %v42 = vld [vmem:[%s1 + $0xd0] sm:$0xff]
  %v47 = vunpack.c.l.b16 %v12
  %v48 = vunpack.c.h.b16 %v12
  %v49 = vunpack.c.l.b16 %v13
  %v50 = vunpack.c.h.b16 %v13
  %v51 = vunpack.c.l.b16 %v14
  %v52 = vunpack.c.h.b16 %v14
  %v53 = vunpack.c.l.b16 %v15
  %v54 = vunpack.c.h.b16 %v15
  %v55 = vpack.c.b16 %v49, %v47
  %v56 = vpack.c.b16 %v50, %v48
  %v57 = vpack.c.b16 %v53, %v51
  %v58 = vpack.c.b16 %v54, %v52
  %v88 = vunpack.c.l.b16 %v16
  %v89 = vunpack.c.h.b16 %v16
  %v90 = vunpack.c.l.b16 %v17
  %v91 = vunpack.c.h.b16 %v17
  %v92 = vunpack.c.l.b16 %v18
  %v93 = vunpack.c.h.b16 %v18
  %v94 = vunpack.c.l.b16 %v19
  %v95 = vunpack.c.h.b16 %v19
  %v96 = vunpack.c.l.b16 %v20
  %v97 = vunpack.c.h.b16 %v20
  %v98 = vunpack.c.l.b16 %v21
  %v99 = vunpack.c.h.b16 %v21
  %v100 = vunpack.c.l.b16 %v22
  %v101 = vunpack.c.h.b16 %v22
  %v102 = vunpack.c.l.b16 %v23
  %v103 = vunpack.c.h.b16 %v23
  %v104 = vunpack.c.l.b16 %v24
  %v105 = vunpack.c.h.b16 %v24
  %v106 = vunpack.c.l.b16 %v25
  %v107 = vunpack.c.h.b16 %v25
  %v108 = vunpack.c.l.b16 %v26
  %v109 = vunpack.c.h.b16 %v26
  %v110 = vunpack.c.l.b16 %v27
  %v111 = vunpack.c.h.b16 %v27
  %v112 = vunpack.c.l.b16 %v28
  %v113 = vunpack.c.h.b16 %v28
  %v114 = vunpack.c.l.b16 %v29
  %v115 = vunpack.c.h.b16 %v29
  %v116 = vunpack.c.l.b16 %v30
  %v117 = vunpack.c.h.b16 %v30
  %v118 = vunpack.c.l.b16 %v31
  %v119 = vunpack.c.h.b16 %v31
  %v120 = vunpack.c.l.b16 %v32
  %v121 = vunpack.c.h.b16 %v32
  %v122 = vunpack.c.l.b16 %v33
  %v123 = vunpack.c.h.b16 %v33
  %v124 = vunpack.c.l.b16 %v34
  %v125 = vunpack.c.h.b16 %v34
  %v126 = vunpack.c.l.b16 %v35
  %v127 = vunpack.c.h.b16 %v35
  %v128 = vunpack.c.l.b16 %v36
  %v129 = vunpack.c.h.b16 %v36
  %v130 = vunpack.c.l.b16 %v37
  %v131 = vunpack.c.h.b16 %v37
  %v132 = vunpack.c.l.b16 %v38
  %v133 = vunpack.c.h.b16 %v38
  %v134 = vunpack.c.l.b16 %v39
  %v135 = vunpack.c.h.b16 %v39
  %v136 = vunpack.c.l.b16 %v40
  %v137 = vunpack.c.h.b16 %v40
  %v138 = vunpack.c.l.b16 %v41
  %v139 = vunpack.c.h.b16 %v41
  %v140 = vunpack.c.l.b16 %v42
  %v141 = vunpack.c.h.b16 %v42
  %v142 = vpack.c.b16 %v90, %v88
  %v143 = vpack.c.b16 %v91, %v89
  %v144 = vpack.c.b16 %v94, %v92
  %v145 = vpack.c.b16 %v95, %v93
  %v146 = vpack.c.b16 %v98, %v96
  %v147 = vpack.c.b16 %v99, %v97
  %v148 = vpack.c.b16 %v102, %v100
  %v149 = vpack.c.b16 %v103, %v101
  %v150 = vpack.c.b16 %v106, %v104
  %v151 = vpack.c.b16 %v107, %v105
  %v152 = vpack.c.b16 %v110, %v108
  %v153 = vpack.c.b16 %v111, %v109
  %v154 = vpack.c.b16 %v114, %v112
  %v155 = vpack.c.b16 %v115, %v113
  %v156 = vpack.c.b16 %v118, %v116
  %v157 = vpack.c.b16 %v119, %v117
  %v158 = vpack.c.b16 %v122, %v120
  %v159 = vpack.c.b16 %v123, %v121
  %v160 = vpack.c.b16 %v126, %v124
  %v161 = vpack.c.b16 %v127, %v125
  %v162 = vpack.c.b16 %v130, %v128
  %v163 = vpack.c.b16 %v131, %v129
  %v164 = vpack.c.b16 %v134, %v132
  %v165 = vpack.c.b16 %v135, %v133
  %v166 = vpack.c.b16 %v138, %v136
  %v167 = vpack.c.b16 %v139, %v137
  %v168 = vpack.c.b16 %v140, %v140
  %v169 = vpack.c.b16 %v141, %v141
  %vm196 = vcmask 719872
  %v198 = vsel %vm196, %v56, 0
  %v201 = vsel %vm196, %v58, 0
  %vm203 = vcmask 1043456
  %v205 = vsel %vm203, %v168, 0
  %v208 = vsel %vm203, %v169, 0
  %210 = vmatprep.subr.bf16.mxu0 %v143
  %211 = vmatpush1.bf16.msra.mxu0 %v142
  %212 = vmatprep.subr.bf16.mxu0 %v145
  %213 = vmatpush1.bf16.msra.mxu0 %v144
  %214 = vmatprep.subr.bf16.mxu0 %v147
  %215 = vmatpush1.bf16.msra.mxu0 %v146
  %216 = vmatprep.subr.bf16.mxu0 %v149
  %217 = vmatpush1.bf16.msra.mxu0 %v148
  %218 = vmatprep.subr.bf16.mxu0 %v151
  %219 = vmatpush1.bf16.msra.mxu0 %v150
  %220 = vmatprep.subr.bf16.mxu0 %v153
  %221 = vmatpush1.bf16.msra.mxu0 %v152
  %222 = vmatprep.subr.bf16.mxu0 %v155
  %223 = vmatpush1.bf16.msra.mxu0 %v154
  %224 = vmatprep.subr.bf16.mxu0 %v157
  %225 = vmatpush1.bf16.msra.mxu0 %v156
  %226 = vmatprep.subr.bf16.mxu0 %v159
  %227 = vmatpush1.bf16.msra.mxu0 %v158
  %228 = vmatprep.subr.bf16.mxu0 %v161
  %229 = vmatpush1.bf16.msra.mxu0 %v160
  %230 = vmatprep.subr.bf16.mxu0 %v163
  %231 = vmatpush1.bf16.msra.mxu0 %v162
  %232 = vmatprep.subr.bf16.mxu0 %v165
  %233 = vmatpush1.bf16.msra.mxu0 %v164
  %234 = vmatprep.subr.bf16.mxu0 %v167
  %235 = vmatpush1.bf16.msra.mxu0 %v166
  %236 = vmatprep.subr.bf16.mxu0 %v208
  %237 = vmatpush1.bf16.msra.mxu0 %v205
  %238 = vmatprep.subr.bf16.mxu0 0
  %239 = vmatpush1.bf16.msra.mxu0 0
  %240 = vmatprep.subr.bf16.mxu0 0
  %241 = vmatpush1.bf16.msra.mxu0 0
  %242 = vmatprep.mubr.bf16.mxu0 %v198
  %243 = vmatmul.mubr.bf16.gmra.mrb[0].mxu0 %v55
  %v244 = vpop.f32.mrb[0].mxu0
  %v245 = vadd.f32 0.0, %v244
  %v246 = vpop.f32.mrb[0].mxu0
  %v247 = vadd.f32 0.0, %v246
  %v248 = vpop.f32.mrb[0].mxu0
  %v249 = vadd.f32 0.0, %v248
  %v250 = vpop.f32.mrb[0].mxu0
  %v251 = vadd.f32 0.0, %v250
  %252 = vmatprep.mubr.bf16.mxu0 %v201
  %253 = vmatmul.mubr.bf16.gmra.mrb[0].mxu0 %v57
  %v254 = vpop.f32.mrb[0].mxu0
  %v255 = vadd.f32 0.0, %v254
  %v256 = vpop.f32.mrb[0].mxu0
  %v257 = vadd.f32 0.0, %v256
  %v258 = vpop.f32.mrb[0].mxu0
  %v259 = vadd.f32 0.0, %v258
  %v260 = vpop.f32.mrb[0].mxu0
  %v261 = vadd.f32 0.0, %v260
  %262 = vdwg.mxu0
  %v263 = vadd.f32 %v245, %v249
  %v264 = vadd.f32 %v263, %v255
  %v265 = vadd.f32 %v264, %v259
  %v266 = vrot.slane %v265, 4
  %v267 = vadd.f32 %v265, %v266
  %v268 = vrot.slane %v267, 2
  %v269 = vadd.f32 %v267, %v268
  %v270 = vrot.slane %v269, 1
  %v271 = vadd.f32 %v269, %v270
  %v272 = vadd.f32 %v247, %v251
  %v273 = vadd.f32 %v272, %v257
  %v274 = vadd.f32 %v273, %v261
  %v275 = vrot.slane %v274, 4
  %v276 = vadd.f32 %v274, %v275
  %v277 = vrot.slane %v276, 2
  %v278 = vadd.f32 %v276, %v277
  %v279 = vrot.slane %v278, 1
  %v280 = vadd.f32 %v278, %v279
  %v281 = vmul.f32 %v245, %v245
  %v282 = vmul.f32 %v247, %v247
  %v283 = vmul.f32 %v249, %v249
  %v284 = vmul.f32 %v251, %v251
  %v285 = vmul.f32 %v255, %v255
  %v286 = vmul.f32 %v257, %v257
  %v287 = vmul.f32 %v259, %v259
  %v288 = vmul.f32 %v261, %v261
  %v289 = vadd.f32 %v281, %v283
  %v290 = vadd.f32 %v289, %v285
  %v291 = vadd.f32 %v290, %v287
  %v292 = vrot.slane %v291, 4
  %v293 = vadd.f32 %v291, %v292
  %v294 = vrot.slane %v293, 2
  %v295 = vadd.f32 %v293, %v294
  %v296 = vrot.slane %v295, 1
  %v297 = vadd.f32 %v295, %v296
  %v298 = vadd.f32 %v282, %v284
  %v299 = vadd.f32 %v298, %v286
  %v300 = vadd.f32 %v299, %v288
  %v301 = vrot.slane %v300, 4
  %v302 = vadd.f32 %v300, %v301
  %v303 = vrot.slane %v302, 2
  %v304 = vadd.f32 %v302, %v303
  %v305 = vrot.slane %v304, 1
  %v306 = vadd.f32 %v304, %v305
  %vm307 = vcmask 1040384
  %v308 = vsel %vm307, %v271, %v297
  %v309 = vsel %vm307, %v280, %v306
  %v312 = vcombine.low %v308, %v309
  %v314 = vunpack.c.l.s4 1983009808
  %v315 = vunpack.c.0.s8 %v314
  %v316 = vlaneseq
  %v317 = vshrl.u32 %v316, 7
  %v318 = vsub.s32 %v315, %v317
  %v319 = vrot.slane %v312, %v318
  %321 = vst [vmem:[%s2] sm:$0xf] %v319
  // Predicated region
  $region10: #{stream2_forward.2} parent=0 // pred_check
    _
  $region11: #{stream2_forward.2} parent=0 // pred_check_branch
    %323 = sbr.rel (0) target = $region13
  $region12: #{stream2_forward.2} parent=0 // pred_region
    _
  $region13: #{stream2_forward.2} parent=0 // pred_fallthru
    _
  // Predicated region
  $region14: #{stream2_forward.2} parent=0 // pred_check
    _
  $region15: #{stream2_forward.2} parent=0 // pred_check_branch
    %325 = sbr.rel (0) target = $region17
  $region16: #{stream2_forward.2} parent=0 // pred_region
    _
  $region17: #{stream2_forward.2} parent=0 // pred_fallthru
    _

// kernel: stream2_forward.3
$region0: #{stream2_forward.3}
  #allocation0 [shape = 'u32[]', space=smem, size = 0x4, offset = 0x4, fixed_abs, tag = 'smem constant byte address 0x4 - core index']
  #allocation1 [shape = 'u32[144,128]{1,0:T(1,128)}', space=vmem, size = 0x12000, scoped, tag = 'internal scratch']
  %s0 = inlined_call_operand.vmem [shape: bf16[2,16,216], index: 0, kind: input, shape index: {}]
  %s1 = inlined_call_operand.vmem [shape: bf16[216,256], index: 1, kind: input, shape index: {}]
  %s2 = inlined_call_operand.vmem [shape: f32[1,256], index: 2, kind: input, shape index: {}]
  %s3 = inlined_call_operand.vmem [shape: f32[1,128], index: 3, kind: input, shape index: {}]
  %s4 = inlined_call_operand.vmem [shape: f32[2,8,128], index: 4, kind: output, shape index: {}]
  %s5 = sld [smem:[#allocation0]]
  $region26: #{stream2_forward.3} parent=0
    _
  %s7 = ssub.s32 1, %s5
  %s8 = scalar_select 0, %s7, %s5
  // Predicated region
  $region2: #{stream2_forward.3} parent=0 // pred_check
    _
  $region3: #{stream2_forward.3} parent=0 // pred_check_branch
    %10 = sbr.rel (0) target = $region5
  $region4: #{stream2_forward.3} parent=0 // pred_region
    _
  $region5: #{stream2_forward.3} parent=0 // pred_fallthru
    _
  // Predicated region
  $region6: #{stream2_forward.3} parent=0 // pred_check
    _
  $region7: #{stream2_forward.3} parent=0 // pred_check_branch
    %12 = sbr.rel (0) target = $region9
  $region8: #{stream2_forward.3} parent=0 // pred_region
    _
  $region9: #{stream2_forward.3} parent=0 // pred_fallthru
    _
  // Predicated region
  $region10: #{stream2_forward.3} parent=0 // pred_check
    _
  $region11: #{stream2_forward.3} parent=0 // pred_check_branch
    %14 = sbr.rel (0) target = $region13
  $region12: #{stream2_forward.3} parent=0 // pred_region
    _
  $region13: #{stream2_forward.3} parent=0 // pred_fallthru
    _
  // Predicated region
  $region14: #{stream2_forward.3} parent=0 // pred_check
    _
  $region15: #{stream2_forward.3} parent=0 // pred_check_branch
    %16 = sbr.rel (0) target = $region17
  $region16: #{stream2_forward.3} parent=0 // pred_region
    _
  $region17: #{stream2_forward.3} parent=0 // pred_fallthru
    _
  %v18 = vld [vmem:[%s0] sm:$0xff]
  %v19 = vld [vmem:[%s0 + $0x8] sm:$0xff]
  %v20 = vld [vmem:[%s0 + $0x10] sm:$0xff]
  %v21 = vld [vmem:[%s0 + $0x18] sm:$0xff]
  %v22 = vld [vmem:[%s1] sm:$0xff]
  %v23 = vld [vmem:[%s1 + $0x8] sm:$0xff]
  %v24 = vld [vmem:[%s1 + $0x10] sm:$0xff]
  %v25 = vld [vmem:[%s1 + $0x18] sm:$0xff]
  %v26 = vld [vmem:[%s1 + $0x20] sm:$0xff]
  %v27 = vld [vmem:[%s1 + $0x28] sm:$0xff]
  %v28 = vld [vmem:[%s1 + $0x30] sm:$0xff]
  %v29 = vld [vmem:[%s1 + $0x38] sm:$0xff]
  %v30 = vld [vmem:[%s1 + $0x40] sm:$0xff]
  %v31 = vld [vmem:[%s1 + $0x48] sm:$0xff]
  %v32 = vld [vmem:[%s1 + $0x50] sm:$0xff]
  %v33 = vld [vmem:[%s1 + $0x58] sm:$0xff]
  %v34 = vld [vmem:[%s1 + $0x60] sm:$0xff]
  %v35 = vld [vmem:[%s1 + $0x68] sm:$0xff]
  %v36 = vld [vmem:[%s1 + $0x70] sm:$0xff]
  %v37 = vld [vmem:[%s1 + $0x78] sm:$0xff]
  %v38 = vld [vmem:[%s1 + $0x80] sm:$0xff]
  %v39 = vld [vmem:[%s1 + $0x88] sm:$0xff]
  %v40 = vld [vmem:[%s1 + $0x90] sm:$0xff]
  %v41 = vld [vmem:[%s1 + $0x98] sm:$0xff]
  %v42 = vld [vmem:[%s1 + $0xa0] sm:$0xff]
  %v43 = vld [vmem:[%s1 + $0xa8] sm:$0xff]
  %v44 = vld [vmem:[%s1 + $0xb0] sm:$0xff]
  %v45 = vld [vmem:[%s1 + $0xb8] sm:$0xff]
  %v46 = vld [vmem:[%s1 + $0xc0] sm:$0xff]
  %v47 = vld [vmem:[%s1 + $0xc8] sm:$0xff]
  %v48 = vld [vmem:[%s1 + $0xd0] sm:$0xff]
  %v53 = vunpack.c.l.b16 %v18
  %v54 = vunpack.c.h.b16 %v18
  %v55 = vunpack.c.l.b16 %v19
  %v56 = vunpack.c.h.b16 %v19
  %v57 = vunpack.c.l.b16 %v20
  %v58 = vunpack.c.h.b16 %v20
  %v59 = vunpack.c.l.b16 %v21
  %v60 = vunpack.c.h.b16 %v21
  %v61 = vpack.c.b16 %v55, %v53
  %v62 = vpack.c.b16 %v56, %v54
  %v63 = vpack.c.b16 %v59, %v57
  %v64 = vpack.c.b16 %v60, %v58
  %v94 = vunpack.c.l.b16 %v22
  %v95 = vunpack.c.h.b16 %v22
  %v96 = vunpack.c.l.b16 %v23
  %v97 = vunpack.c.h.b16 %v23
  %v98 = vunpack.c.l.b16 %v24
  %v99 = vunpack.c.h.b16 %v24
  %v100 = vunpack.c.l.b16 %v25
  %v101 = vunpack.c.h.b16 %v25
  %v102 = vunpack.c.l.b16 %v26
  %v103 = vunpack.c.h.b16 %v26
  %v104 = vunpack.c.l.b16 %v27
  %v105 = vunpack.c.h.b16 %v27
  %v106 = vunpack.c.l.b16 %v28
  %v107 = vunpack.c.h.b16 %v28
  %v108 = vunpack.c.l.b16 %v29
  %v109 = vunpack.c.h.b16 %v29
  %v110 = vunpack.c.l.b16 %v30
  %v111 = vunpack.c.h.b16 %v30
  %v112 = vunpack.c.l.b16 %v31
  %v113 = vunpack.c.h.b16 %v31
  %v114 = vunpack.c.l.b16 %v32
  %v115 = vunpack.c.h.b16 %v32
  %v116 = vunpack.c.l.b16 %v33
  %v117 = vunpack.c.h.b16 %v33
  %v118 = vunpack.c.l.b16 %v34
  %v119 = vunpack.c.h.b16 %v34
  %v120 = vunpack.c.l.b16 %v35
  %v121 = vunpack.c.h.b16 %v35
  %v122 = vunpack.c.l.b16 %v36
  %v123 = vunpack.c.h.b16 %v36
  %v124 = vunpack.c.l.b16 %v37
  %v125 = vunpack.c.h.b16 %v37
  %v126 = vunpack.c.l.b16 %v38
  %v127 = vunpack.c.h.b16 %v38
  %v128 = vunpack.c.l.b16 %v39
  %v129 = vunpack.c.h.b16 %v39
  %v130 = vunpack.c.l.b16 %v40
  %v131 = vunpack.c.h.b16 %v40
  %v132 = vunpack.c.l.b16 %v41
  %v133 = vunpack.c.h.b16 %v41
  %v134 = vunpack.c.l.b16 %v42
  %v135 = vunpack.c.h.b16 %v42
  %v136 = vunpack.c.l.b16 %v43
  %v137 = vunpack.c.h.b16 %v43
  %v138 = vunpack.c.l.b16 %v44
  %v139 = vunpack.c.h.b16 %v44
  %v140 = vunpack.c.l.b16 %v45
  %v141 = vunpack.c.h.b16 %v45
  %v142 = vunpack.c.l.b16 %v46
  %v143 = vunpack.c.h.b16 %v46
  %v144 = vunpack.c.l.b16 %v47
  %v145 = vunpack.c.h.b16 %v47
  %v146 = vunpack.c.l.b16 %v48
  %v147 = vunpack.c.h.b16 %v48
  %v148 = vpack.c.b16 %v96, %v94
  %v149 = vpack.c.b16 %v97, %v95
  %v150 = vpack.c.b16 %v100, %v98
  %v151 = vpack.c.b16 %v101, %v99
  %v152 = vpack.c.b16 %v104, %v102
  %v153 = vpack.c.b16 %v105, %v103
  %v154 = vpack.c.b16 %v108, %v106
  %v155 = vpack.c.b16 %v109, %v107
  %v156 = vpack.c.b16 %v112, %v110
  %v157 = vpack.c.b16 %v113, %v111
  %v158 = vpack.c.b16 %v116, %v114
  %v159 = vpack.c.b16 %v117, %v115
  %v160 = vpack.c.b16 %v120, %v118
  %v161 = vpack.c.b16 %v121, %v119
  %v162 = vpack.c.b16 %v124, %v122
  %v163 = vpack.c.b16 %v125, %v123
  %v164 = vpack.c.b16 %v128, %v126
  %v165 = vpack.c.b16 %v129, %v127
  %v166 = vpack.c.b16 %v132, %v130
  %v167 = vpack.c.b16 %v133, %v131
  %v168 = vpack.c.b16 %v136, %v134
  %v169 = vpack.c.b16 %v137, %v135
  %v170 = vpack.c.b16 %v140, %v138
  %v171 = vpack.c.b16 %v141, %v139
  %v172 = vpack.c.b16 %v144, %v142
  %v173 = vpack.c.b16 %v145, %v143
  %v174 = vpack.c.b16 %v146, %v146
  %v175 = vpack.c.b16 %v147, %v147
  %vm202 = vcmask 719872
  %v204 = vsel %vm202, %v62, 0
  %v207 = vsel %vm202, %v64, 0
  %vm209 = vcmask 1043456
  %v211 = vsel %vm209, %v174, 0
  %v214 = vsel %vm209, %v175, 0
  %216 = vmatprep.subr.bf16.mxu0 %v149
  %217 = vmatpush1.bf16.msra.mxu0 %v148
  %218 = vmatprep.subr.bf16.mxu0 %v151
  %219 = vmatpush1.bf16.msra.mxu0 %v150
  %220 = vmatprep.subr.bf16.mxu0 %v153
  %221 = vmatpush1.bf16.msra.mxu0 %v152
  %222 = vmatprep.subr.bf16.mxu0 %v155
  %223 = vmatpush1.bf16.msra.mxu0 %v154
  %224 = vmatprep.subr.bf16.mxu0 %v157
  %225 = vmatpush1.bf16.msra.mxu0 %v156
  %226 = vmatprep.subr.bf16.mxu0 %v159
  %227 = vmatpush1.bf16.msra.mxu0 %v158
  %228 = vmatprep.subr.bf16.mxu0 %v161
  %229 = vmatpush1.bf16.msra.mxu0 %v160
  %230 = vmatprep.subr.bf16.mxu0 %v163
  %231 = vmatpush1.bf16.msra.mxu0 %v162
  %232 = vmatprep.subr.bf16.mxu0 %v165
  %233 = vmatpush1.bf16.msra.mxu0 %v164
  %234 = vmatprep.subr.bf16.mxu0 %v167
  %235 = vmatpush1.bf16.msra.mxu0 %v166
  %236 = vmatprep.subr.bf16.mxu0 %v169
  %237 = vmatpush1.bf16.msra.mxu0 %v168
  %238 = vmatprep.subr.bf16.mxu0 %v171
  %239 = vmatpush1.bf16.msra.mxu0 %v170
  %240 = vmatprep.subr.bf16.mxu0 %v173
  %241 = vmatpush1.bf16.msra.mxu0 %v172
  %242 = vmatprep.subr.bf16.mxu0 %v214
  %243 = vmatpush1.bf16.msra.mxu0 %v211
  %244 = vmatprep.subr.bf16.mxu0 0
  %245 = vmatpush1.bf16.msra.mxu0 0
  %246 = vmatprep.subr.bf16.mxu0 0
  %247 = vmatpush1.bf16.msra.mxu0 0
  %248 = vmatprep.mubr.bf16.mxu0 %v204
  %249 = vmatmul.mubr.bf16.gmra.mrb[0].mxu0 %v61
  %v250 = vpop.f32.mrb[0].mxu0
  %v251 = vadd.f32 0.0, %v250
  %v252 = vpop.f32.mrb[0].mxu0
  %v253 = vadd.f32 0.0, %v252
  %v254 = vpop.f32.mrb[0].mxu0
  %v255 = vadd.f32 0.0, %v254
  %v256 = vpop.f32.mrb[0].mxu0
  %v257 = vadd.f32 0.0, %v256
  %258 = vmatprep.mubr.bf16.mxu0 %v207
  %259 = vmatmul.mubr.bf16.gmra.mrb[0].mxu0 %v63
  %v260 = vpop.f32.mrb[0].mxu0
  %v261 = vadd.f32 0.0, %v260
  %v262 = vpop.f32.mrb[0].mxu0
  %v263 = vadd.f32 0.0, %v262
  %v264 = vpop.f32.mrb[0].mxu0
  %v265 = vadd.f32 0.0, %v264
  %v266 = vpop.f32.mrb[0].mxu0
  %v267 = vadd.f32 0.0, %v266
  %268 = vdwg.mxu0
  %v269 = vld [vmem:[%s2] sm:$0x3]
  %v271 = vlaneseq
  %v272 = vshrl.u32 %v271, 7
  %v273 = vsub.s32 0, %v272
  %v274 = vrot.slane %v269, %v273
  %v275 = vlaneseq
  %v276 = vshrl.u32 %v275, 7
  %v277 = vsub.s32 1, %v276
  %v278 = vrot.slane %v269, %v277
  %v281 = vmul.f32 %v251, %v274
  %v282 = vmul.f32 %v253, %v278
  %v283 = vmul.f32 %v255, %v274
  %v284 = vmul.f32 %v257, %v278
  %v285 = vmul.f32 %v261, %v274
  %v286 = vmul.f32 %v263, %v278
  %v287 = vmul.f32 %v265, %v274
  %v288 = vmul.f32 %v267, %v278
  %v289 = vmax.f32 %v281, %v282
  %v290 = vmax.f32 %v283, %v284
  %v291 = vmax.f32 %v285, %v286
  %v292 = vmax.f32 %v287, %v288
  %v297 = vcombine.high %v289, %v289
  %v299 = vunpack.c.l.s4 1983009808
  %v300 = vunpack.c.0.s8 %v299
  %v301 = vlaneseq
  %v302 = vshrl.u32 %v301, 7
  %v303 = vsub.s32 %v300, %v302
  %v304 = vrot.slane %v289, %v303
  %v306 = vunpack.c.l.s4 1983009808
  %v307 = vunpack.c.0.s8 %v306
  %v308 = vlaneseq
  %v309 = vshrl.u32 %v308, 7
  %v310 = vsub.s32 %v307, %v309
  %v311 = vrot.slane %v297, %v310
  %v312 = vcombine.high %v304, %v304
  %v313 = vcombine.high %v311, %v311
  %v314 = vcombine.high %v290, %v290
  %v316 = vunpack.c.l.s4 1983009808
  %v317 = vunpack.c.0.s8 %v316
  %v318 = vlaneseq
  %v319 = vshrl.u32 %v318, 7
  %v320 = vsub.s32 %v317, %v319
  %v321 = vrot.slane %v290, %v320
  %v323 = vunpack.c.l.s4 1983009808
  %v324 = vunpack.c.0.s8 %v323
  %v325 = vlaneseq
  %v326 = vshrl.u32 %v325, 7
  %v327 = vsub.s32 %v324, %v326
  %v328 = vrot.slane %v314, %v327
  %v329 = vcombine.high %v321, %v321
  %v330 = vcombine.high %v328, %v328
  %v331 = vcombine.high %v291, %v291
  %v333 = vunpack.c.l.s4 1983009808
  %v334 = vunpack.c.0.s8 %v333
  %v335 = vlaneseq
  %v336 = vshrl.u32 %v335, 7
  %v337 = vsub.s32 %v334, %v336
  %v338 = vrot.slane %v291, %v337
  %v340 = vunpack.c.l.s4 1983009808
  %v341 = vunpack.c.0.s8 %v340
  %v342 = vlaneseq
  %v343 = vshrl.u32 %v342, 7
  %v344 = vsub.s32 %v341, %v343
  %v345 = vrot.slane %v331, %v344
  %v346 = vcombine.high %v338, %v338
  %v347 = vcombine.high %v345, %v345
  %v348 = vcombine.high %v292, %v292
  %v350 = vunpack.c.l.s4 1983009808
  %v351 = vunpack.c.0.s8 %v350
  %v352 = vlaneseq
  %v353 = vshrl.u32 %v352, 7
  %v354 = vsub.s32 %v351, %v353
  %v355 = vrot.slane %v292, %v354
  %v357 = vunpack.c.l.s4 1983009808
  %v358 = vunpack.c.0.s8 %v357
  %v359 = vlaneseq
  %v360 = vshrl.u32 %v359, 7
  %v361 = vsub.s32 %v358, %v360
  %v362 = vrot.slane %v348, %v361
  %v363 = vcombine.high %v355, %v355
  %v364 = vcombine.high %v362, %v362
  %v381 = vrot.slane %v304, 7
  %v382 = vrot.slane %v381, 2
  %v383 = vrot.slane %v312, 7
  %v384 = vrot.slane %v383, 2
  %v385 = vrot.slane %v311, 7
  %v386 = vrot.slane %v385, 2
  %v387 = vrot.slane %v313, 7
  %v388 = vrot.slane %v387, 2
  %v389 = vrot.slane %v321, 7
  %v390 = vrot.slane %v389, 2
  %v391 = vrot.slane %v329, 7
  %v392 = vrot.slane %v391, 2
  %v393 = vrot.slane %v328, 7
  %v394 = vrot.slane %v393, 2
  %v395 = vrot.slane %v330, 7
  %v396 = vrot.slane %v395, 2
  %v397 = vrot.slane %v338, 7
  %v398 = vrot.slane %v397, 2
  %v399 = vrot.slane %v346, 7
  %v400 = vrot.slane %v399, 2
  %v401 = vrot.slane %v345, 7
  %v402 = vrot.slane %v401, 2
  %v403 = vrot.slane %v347, 7
  %v404 = vrot.slane %v403, 2
  %v405 = vrot.slane %v355, 7
  %v406 = vrot.slane %v405, 2
  %v407 = vrot.slane %v363, 7
  %v408 = vrot.slane %v407, 2
  %v409 = vrot.slane %v362, 7
  %v410 = vrot.slane %v409, 2
  %v411 = vrot.slane %v364, 7
  %v412 = vrot.slane %v411, 2
  %v429 = vmax.f32 %v304, %v382
  %v430 = vmax.f32 %v312, %v384
  %v431 = vmax.f32 %v311, %v386
  %v432 = vmax.f32 %v313, %v388
  %v433 = vmax.f32 %v321, %v390
  %v434 = vmax.f32 %v329, %v392
  %v435 = vmax.f32 %v328, %v394
  %v436 = vmax.f32 %v330, %v396
  %v437 = vmax.f32 %v338, %v398
  %v438 = vmax.f32 %v346, %v400
  %v439 = vmax.f32 %v345, %v402
  %v440 = vmax.f32 %v347, %v404
  %v441 = vmax.f32 %v355, %v406
  %v442 = vmax.f32 %v363, %v408
  %v443 = vmax.f32 %v362, %v410
  %v444 = vmax.f32 %v364, %v412
  %v445 = vld [vmem:[%s3] sm:$0x1]
  %v447 = vlaneseq
  %v448 = vshrl.u32 %v447, 7
  %v449 = vsub.s32 0, %v448
  %v450 = vrot.slane %v445, %v449
  %v451 = vcombine.high %v450, %v450
  %v453 = vunpack.c.l.s4 1983009808
  %v454 = vunpack.c.0.s8 %v453
  %v455 = vlaneseq
  %v456 = vshrl.u32 %v455, 7
  %v457 = vsub.s32 %v454, %v456
  %v458 = vrot.slane %v450, %v457
  %v460 = vunpack.c.l.s4 1983009808
  %v461 = vunpack.c.0.s8 %v460
  %v462 = vlaneseq
  %v463 = vshrl.u32 %v462, 7
  %v464 = vsub.s32 %v461, %v463
  %v465 = vrot.slane %v451, %v464
  %v466 = vcombine.high %v458, %v458
  %v467 = vcombine.high %v465, %v465
  %v468 = vrot.slane %v458, 1
  %v469 = vrot.slane %v466, 1
  %v470 = vrot.slane %v465, 1
  %v471 = vrot.slane %v467, 1
  %v480 = vadd.f32 %v429, %v458
  %v481 = vadd.f32 %v430, %v468
  %v482 = vadd.f32 %v431, %v466
  %v483 = vadd.f32 %v432, %v469
  %v484 = vadd.f32 %v433, %v465
  %v485 = vadd.f32 %v434, %v470
  %v486 = vadd.f32 %v435, %v467
  %v487 = vadd.f32 %v436, %v471
  %v488 = vadd.f32 %v437, %v458
  %v489 = vadd.f32 %v438, %v468
  %v490 = vadd.f32 %v439, %v466
  %v491 = vadd.f32 %v440, %v469
  %v492 = vadd.f32 %v441, %v465
  %v493 = vadd.f32 %v442, %v470
  %v494 = vadd.f32 %v443, %v467
  %v495 = vadd.f32 %v444, %v471
  %v496 = vtanh.pop %v480
  %v497 = vtanh.pop %v481
  %v498 = vtanh.pop %v482
  %v499 = vtanh.pop %v483
  %v500 = vtanh.pop %v484
  %v501 = vtanh.pop %v485
  %v502 = vtanh.pop %v486
  %v503 = vtanh.pop %v487
  %v504 = vtanh.pop %v488
  %v505 = vtanh.pop %v489
  %v506 = vtanh.pop %v490
  %v507 = vtanh.pop %v491
  %v508 = vtanh.pop %v492
  %v509 = vtanh.pop %v493
  %v510 = vtanh.pop %v494
  %v511 = vtanh.pop %v495
  %v528 = vlaneseq
  %v529 = vshrl.u32 %v528, 7
  %v530 = vsub.s32 0, %v529
  %v531 = vrot.slane %v496, %v530
  %v532 = vlaneseq
  %v533 = vshrl.u32 %v532, 7
  %v534 = vsub.s32 0, %v533
  %v535 = vrot.slane %v497, %v534
  %v536 = vlaneseq
  %v537 = vshrl.u32 %v536, 7
  %v538 = vsub.s32 0, %v537
  %v539 = vrot.slane %v498, %v538
  %v540 = vlaneseq
  %v541 = vshrl.u32 %v540, 7
  %v542 = vsub.s32 0, %v541
  %v543 = vrot.slane %v499, %v542
  %v544 = vlaneseq
  %v545 = vshrl.u32 %v544, 7
  %v546 = vsub.s32 0, %v545
  %v547 = vrot.slane %v500, %v546
  %v548 = vlaneseq
  %v549 = vshrl.u32 %v548, 7
  %v550 = vsub.s32 0, %v549
  %v551 = vrot.slane %v501, %v550
  %v552 = vlaneseq
  %v553 = vshrl.u32 %v552, 7
  %v554 = vsub.s32 0, %v553
  %v555 = vrot.slane %v502, %v554
  %v556 = vlaneseq
  %v557 = vshrl.u32 %v556, 7
  %v558 = vsub.s32 0, %v557
  %v559 = vrot.slane %v503, %v558
  %v560 = vlaneseq
  %v561 = vshrl.u32 %v560, 7
  %v562 = vsub.s32 0, %v561
  %v563 = vrot.slane %v504, %v562
  %v564 = vlaneseq
  %v565 = vshrl.u32 %v564, 7
  %v566 = vsub.s32 0, %v565
  %v567 = vrot.slane %v505, %v566
  %v568 = vlaneseq
  %v569 = vshrl.u32 %v568, 7
  %v570 = vsub.s32 0, %v569
  %v571 = vrot.slane %v506, %v570
  %v572 = vlaneseq
  %v573 = vshrl.u32 %v572, 7
  %v574 = vsub.s32 0, %v573
  %v575 = vrot.slane %v507, %v574
  %v576 = vlaneseq
  %v577 = vshrl.u32 %v576, 7
  %v578 = vsub.s32 0, %v577
  %v579 = vrot.slane %v508, %v578
  %v580 = vlaneseq
  %v581 = vshrl.u32 %v580, 7
  %v582 = vsub.s32 0, %v581
  %v583 = vrot.slane %v509, %v582
  %v584 = vlaneseq
  %v585 = vshrl.u32 %v584, 7
  %v586 = vsub.s32 0, %v585
  %v587 = vrot.slane %v510, %v586
  %v588 = vlaneseq
  %v589 = vshrl.u32 %v588, 7
  %v590 = vsub.s32 0, %v589
  %v591 = vrot.slane %v511, %v590
  %vm592 = vcmask 1041409
  %v593 = vsel %vm592, %v535, %v531
  %vm594 = vcmask 1042434
  %v595 = vsel %vm594, %v539, %v593
  %vm596 = vcmask 1043459
  %v597 = vsel %vm596, %v543, %v595
  %vm598 = vcmask 1044484
  %v599 = vsel %vm598, %v547, %v597
  %vm600 = vcmask 1045509
  %v601 = vsel %vm600, %v551, %v599
  %vm602 = vcmask 1046534
  %v603 = vsel %vm602, %v555, %v601
  %vm604 = vcmask 1047559
  %v605 = vsel %vm604, %v559, %v603
  %v606 = vsel %vm592, %v567, %v563
  %v607 = vsel %vm594, %v571, %v606
  %v608 = vsel %vm596, %v575, %v607
  %v609 = vsel %vm598, %v579, %v608
  %v610 = vsel %vm600, %v583, %v609
  %v611 = vsel %vm602, %v587, %v610
  %v612 = vsel %vm604, %v591, %v611
  %615 = vst [vmem:[%s4] sm:$0xff] %v605
  %616 = vst [vmem:[%s4 + $0x8] sm:$0xff] %v612
  // Predicated region
  $region18: #{stream2_forward.3} parent=0 // pred_check
    _
  $region19: #{stream2_forward.3} parent=0 // pred_check_branch
    %618 = sbr.rel (0) target = $region21
  $region20: #{stream2_forward.3} parent=0 // pred_region
    _
  $region21: #{stream2_forward.3} parent=0 // pred_fallthru
    _
  // Predicated region
  $region22: #{stream2_forward.3} parent=0 // pred_check
    _
  $region23: #{stream2_forward.3} parent=0 // pred_check_branch
    %620 = sbr.rel (0) target = $region25
  $region24: #{stream2_forward.3} parent=0 // pred_region
    _
  $region25: #{stream2_forward.3} parent=0 // pred_fallthru
    _

</llo_original>
